<compile_context>
chip_gen: v5e
topology: v5e:2x2
jax: 0.10.0
libtpu: 0.0.40
codegen_flags: <defaults>
</compile_context>

<pallas_src>
import math
import jax
import jax.numpy as jnp
from jax.experimental import pallas as pl
from jax.experimental.pallas import tpu as pltpu


# ----------------------------- config (MelConfig equivalent) -----------------------------
SAMPLE_RATE = 16000
N_FFT = 64
WIN_LENGTH = 64
HOP_LENGTH = 16
N_MELS = 16
F_MIN = 0.0
F_MAX = SAMPLE_RATE / 2.0
POWER = 2.0               # torchaudio MelSpectrogram default
CLAMP_MIN = 1e-5

N_FREQS = N_FFT // 2 + 1  # 33 rFFT bins
PAD_FREQ = 40             # freq axis zero-padded 33 -> 40 (sublane-aligned re/im halves)
TILE_F_MAX = 4096         # frames (lanes) per grid step (multiple of 128)


def _round_up(v: int, m: int) -> int:
    return -(-v // m) * m


# ----------------------------- deterministic "parameter" builders -----------------------------
def hann_window(win_length: int) -> jnp.ndarray:
    # torch.hann_window(win_length, periodic=True)
    n = jnp.arange(win_length, dtype=jnp.float32)
    return 0.5 * (1.0 - jnp.cos(2.0 * math.pi * n / win_length))


def mel_filterbank(n_freqs: int, f_min: float, f_max: float, n_mels: int,
                   sample_rate: int) -> jnp.ndarray:
    # torchaudio.functional.melscale_fbanks, mel_scale="htk", norm=None
    def hz_to_mel(f):
        return 2595.0 * jnp.log10(1.0 + f / 700.0)

    def mel_to_hz(m):
        return 700.0 * (10.0 ** (m / 2595.0) - 1.0)

    all_freqs = jnp.linspace(0.0, sample_rate // 2, n_freqs)          # (n_freqs,)
    m_min = hz_to_mel(jnp.asarray(f_min))
    m_max = hz_to_mel(jnp.asarray(f_max))
    m_pts = jnp.linspace(m_min, m_max, n_mels + 2)                    # (n_mels+2,)
    f_pts = mel_to_hz(m_pts)

    f_diff = f_pts[1:] - f_pts[:-1]                                   # (n_mels+1,)
    slopes = f_pts[None, :] - all_freqs[:, None]                      # (n_freqs, n_mels+2)
    down_slopes = -slopes[:, :-2] / f_diff[:-1]                       # (n_freqs, n_mels)
    up_slopes = slopes[:, 2:] / f_diff[1:]                            # (n_freqs, n_mels)
    fb = jnp.maximum(0.0, jnp.minimum(down_slopes, up_slopes))
    return fb.astype(jnp.float32)                                     # (n_freqs, n_mels)


def dft_matrix_t() -> jnp.ndarray:
    """Fused, window-folded rDFT constant of shape (2*PAD_FREQ, N_FFT) = (80, 64).

    Rows [0, N_FREQS)                 : hann(n) * cos(2*pi*k*n/N)
    Rows [PAD_FREQ, PAD_FREQ+N_FREQS) : hann(n) * (-sin(2*pi*k*n/N))
    All other rows are exactly zero (padded "frequencies" carry zero power)."""
    assert WIN_LENGTH == N_FFT, "window fold assumes win_length == n_fft"
    n = jnp.arange(N_FFT, dtype=jnp.float32)[None, :]                 # (1, n_fft)
    k = jnp.arange(N_FREQS, dtype=jnp.float32)[:, None]               # (n_freqs, 1)
    ang = 2.0 * math.pi * k * n / N_FFT
    win = hann_window(WIN_LENGTH)[None, :]                            # (1, n_fft)
    cos_w = jnp.cos(ang) * win                                        # (n_freqs, n_fft)
    sin_w = -jnp.sin(ang) * win
    m = jnp.zeros((2 * PAD_FREQ, N_FFT), jnp.float32)
    m = m.at[:N_FREQS, :].set(cos_w)
    m = m.at[PAD_FREQ:PAD_FREQ + N_FREQS, :].set(sin_w)
    return m


def mel_matrix_t() -> jnp.ndarray:
    """Mel filterbank, transposed and zero-padded to (N_MELS, PAD_FREQ) = (16, 40)."""
    fb = mel_filterbank(N_FREQS, F_MIN, F_MAX, N_MELS, SAMPLE_RATE)   # (n_freqs, n_mels)
    m = jnp.zeros((N_MELS, PAD_FREQ), jnp.float32)
    m = m.at[:, :N_FREQS].set(fb.T)
    return m


# ----------------------------- Pallas kernel -----------------------------
def _logmel_kernel(w_ref, dft_ref, mel_ref, out_ref):
    # w_ref  : (N_FFT, tile_f)       pre-framed, frames on the LANE axis
    # dft_ref: (2*PAD_FREQ, N_FFT)   window-folded fused cos/sin DFT constant
    # mel_ref: (N_MELS, PAD_FREQ)    transposed, zero-padded mel filterbank
    # out_ref: (N_MELS, tile_f)      log-mel, frames on the lane axis (lane-dense store)
    spec = jnp.dot(dft_ref[...], w_ref[...],
                   preferred_element_type=jnp.float32)                # (2*PAD_FREQ, tile_f)
    re = spec[:PAD_FREQ, :]                                           # sublane-aligned halves
    im = spec[PAD_FREQ:, :]
    power = re * re + im * im                                         # |X|^2 (POWER == 2.0)
    mel = jnp.dot(mel_ref[...], power,
                  preferred_element_type=jnp.float32)                 # (N_MELS, tile_f)
    out_ref[...] = jnp.log(jnp.maximum(mel, CLAMP_MIN))


# ----------------------------- wrapper -----------------------------
def log_mel_spectrogram(x: jnp.ndarray, *, tile_f_max: int = TILE_F_MAX) -> jnp.ndarray:
    """x: (B, T) float32 waveform -> (B, n_mels, n_frames) log-mel, matching
    torchaudio.transforms.MelSpectrogram (center=True, reflect pad, hann window,
    power=2, norm=None, mel_scale='htk') followed by log(clamp(., 1e-5))."""
    assert N_FFT % HOP_LENGTH == 0
    assert tile_f_max % 128 == 0
    x = x.astype(jnp.float32)
    B, T = x.shape
    pad = N_FFT // 2
    assert T > pad, "reflect padding requires T > n_fft // 2"
    xp = jnp.pad(x, ((0, 0), (pad, pad)), mode="reflect")             # center=True
    n_frames = 1 + T // HOP_LENGTH
    n_shift = N_FFT // HOP_LENGTH                                     # = 4

    # Pre-shifted framing in the wrapper (cheap XLA reshapes; ~4x waveform bytes):
    #   frames[b, q*HOP + r, c] = xp[b, c*HOP + q*HOP + r]  ->  (B, N_FFT, n_frames)
    frames = jnp.concatenate(
        [jnp.swapaxes(
            xp[:, q * HOP_LENGTH:(q + n_frames) * HOP_LENGTH]
            .reshape(B, n_frames, HOP_LENGTH), 1, 2)
         for q in range(n_shift)], axis=1)                            # (B, N_FFT, n_frames)

    # Fold batch onto the frame/lane axis so every grid step is a full tile of MXU work.
    c_real = B * n_frames
    if c_real <= 128:
        n_tiles, tile_f = 1, 128
    else:
        n_tiles = max(-(-c_real // tile_f_max), 2)        # >=2 steps: keep v7x's 2 TCs busy
        tile_f = _round_up(-(-c_real // n_tiles), 128)
        n_tiles = -(-c_real // tile_f)
    c_pad = n_tiles * tile_f

    w = jnp.transpose(frames, (1, 0, 2)).reshape(N_FFT, c_real)       # (N_FFT, B*n_frames)
    w = jnp.pad(w, ((0, 0), (0, c_pad - c_real)))                     # padded frames -> 0

    dft_t = dft_matrix_t()                                            # (80, 64)
    mel_t = mel_matrix_t()                                            # (16, 40)

    out = pl.pallas_call(
        _logmel_kernel,
        out_shape=jax.ShapeDtypeStruct((N_MELS, c_pad), jnp.float32),
        grid_spec=pltpu.PrefetchScalarGridSpec(
            num_scalar_prefetch=0,
            grid=(n_tiles,),
            in_specs=[
                pl.BlockSpec((N_FFT, tile_f), lambda j: (0, j)),
                # small constants, DMA'd once and resident
                pl.BlockSpec((2 * PAD_FREQ, N_FFT), lambda j: (0, 0)),
                pl.BlockSpec((N_MELS, PAD_FREQ), lambda j: (0, 0)),
            ],
            out_specs=pl.BlockSpec((N_MELS, tile_f), lambda j: (0, j)),
        ),
        compiler_params=pltpu.CompilerParams(
            dimension_semantics=("parallel",),
            vmem_limit_bytes=32 << 20,       # explicit: safe on v5e/v6e/v7x, >> working set
        ),
    )(w, dft_t, mel_t)

    # Unfold batch and drop padded frames; result is already (B, n_mels, n_frames) layout.
    out = out[:, :c_real].reshape(N_MELS, B, n_frames)
    return jnp.transpose(out, (1, 0, 2))


# ----------------------------- pure-JAX reference for sanity -----------------------------
def _reference(x):
    x = x.astype(jnp.float32)
    pad = N_FFT // 2
    xp = jnp.pad(x, ((0, 0), (pad, pad)), mode="reflect")
    n_frames = 1 + (xp.shape[1] - N_FFT) // HOP_LENGTH
    idx = jnp.arange(n_frames)[:, None] * HOP_LENGTH + jnp.arange(N_FFT)[None, :]
    frames = xp[:, idx] * hann_window(WIN_LENGTH)[None, None, :]
    spec = jnp.fft.rfft(frames, axis=-1)
    power = jnp.abs(spec) ** 2
    mel = power @ mel_filterbank(N_FREQS, F_MIN, F_MAX, N_MELS, SAMPLE_RATE)
    return jnp.transpose(jnp.log(jnp.maximum(mel, CLAMP_MIN)), (0, 2, 1))


if __name__ == "__main__":
    key = jax.random.PRNGKey(0)
    B, T = 2, 256
    x = jax.random.normal(key, (B, T), dtype=jnp.float32)

    y = log_mel_spectrogram(x)
    jax.block_until_ready(y)

    y_ref = _reference(x)
    assert y.shape == (B, N_MELS, 1 + T // HOP_LENGTH), y.shape
    assert jnp.allclose(y, y_ref, atol=1e-3, rtol=1e-3), float(jnp.max(jnp.abs(y - y_ref)))

    print("KERNEL_OK")
</pallas_src>

<mosaic_0001>
module attributes {stable_mosaic.version = 11 : i64} {
  func.func @_logmel_kernel(%arg0: i32, %arg1: memref<64x128xf32, #tpu.memory_space<vmem>>, %arg2: memref<80x64xf32, #tpu.memory_space<vmem>>, %arg3: memref<16x40xf32, #tpu.memory_space<vmem>>, %arg4: memref<16x128xf32, #tpu.memory_space<vmem>>) attributes {dimension_semantics = [#tpu.dimension_semantics<parallel>], iteration_bounds = array<i64: 1>, scalar_prefetch = 0 : i64, scratch_operands = 0 : i64, tpu.core_type = #tpu.core_type<tc>, window_params = [{transform_indices = @transform_0, window_bounds = array<i64: 64, 128>}, {pipeline_mode = #tpu.pipeline_mode<synchronous>, transform_indices = @transform_1, window_bounds = array<i64: 80, 64>}, {pipeline_mode = #tpu.pipeline_mode<synchronous>, transform_indices = @transform_2, window_bounds = array<i64: 16, 40>}, {transform_indices = @transform_3, window_bounds = array<i64: 16, 128>}]} {
    %c0 = arith.constant 0 : index
    %c0_0 = arith.constant 0 : index
    %0 = vector.load %arg2[%c0, %c0_0] : memref<80x64xf32, #tpu.memory_space<vmem>>, vector<80x64xf32>
    %c0_1 = arith.constant 0 : index
    %c0_2 = arith.constant 0 : index
    %1 = vector.load %arg1[%c0_1, %c0_2] : memref<64x128xf32, #tpu.memory_space<vmem>>, vector<64x128xf32>
    %cst = arith.constant dense<0.000000e+00> : vector<80x128xf32>
    %2 = tpu.matmul %0, %1, %cst {dimension_numbers = #tpu.dot_dimension_numbers<[1], [0], [0], [1], [0, 0, 1, 1], [], []>} : vector<80x64xf32>, vector<64x128xf32>, vector<80x128xf32> -> vector<80x128xf32>
    %3 = vector.extract_strided_slice %2 {offsets = [0, 0], sizes = [40, 128], strides = [1, 1]} : vector<80x128xf32> to vector<40x128xf32>
    %4 = vector.extract_strided_slice %2 {offsets = [40, 0], sizes = [40, 128], strides = [1, 1]} : vector<80x128xf32> to vector<40x128xf32>
    %5 = arith.mulf %3, %3 : vector<40x128xf32>
    %6 = arith.mulf %4, %4 : vector<40x128xf32>
    %7 = arith.addf %5, %6 : vector<40x128xf32>
    %c0_3 = arith.constant 0 : index
    %c0_4 = arith.constant 0 : index
    %8 = vector.load %arg3[%c0_3, %c0_4] : memref<16x40xf32, #tpu.memory_space<vmem>>, vector<16x40xf32>
    %cst_5 = arith.constant dense<0.000000e+00> : vector<16x128xf32>
    %9 = tpu.matmul %8, %7, %cst_5 {dimension_numbers = #tpu.dot_dimension_numbers<[1], [0], [0], [1], [0, 0, 1, 1], [], []>} : vector<16x40xf32>, vector<40x128xf32>, vector<16x128xf32> -> vector<16x128xf32>
    %cst_6 = arith.constant 9.99999974E-6 : f32
    %10 = vector.broadcast %cst_6 : f32 to vector<16x128xf32>
    %11 = arith.maximumf %9, %10 : vector<16x128xf32>
    %12 = math.log %11 : vector<16x128xf32>
    %c0_7 = arith.constant 0 : index
    %c0_8 = arith.constant 0 : index
    %13 = vector.load %arg4[%c0_7, %c0_8] : memref<16x128xf32, #tpu.memory_space<vmem>>, vector<16x128xf32>
    tpu.vector_store %arg4[%c0_7, %c0_8], %12 {strides = array<i32>} : memref<16x128xf32, #tpu.memory_space<vmem>>, vector<16x128xf32>,
    return
  }
  func.func @transform_0(%arg0: i32) -> (i32, i32) {
    %c0_i32 = arith.constant 0 : i32
    %c0_i32_0 = arith.constant 0 : i32
    return %c0_i32, %arg0 : i32, i32
  }
  func.func @transform_1(%arg0: i32) -> (i32, i32) {
    %c0_i32 = arith.constant 0 : i32
    %c0_i32_0 = arith.constant 0 : i32
    %c0_i32_1 = arith.constant 0 : i32
    return %c0_i32, %c0_i32_0 : i32, i32
  }
  func.func @transform_2(%arg0: i32) -> (i32, i32) {
    %c0_i32 = arith.constant 0 : i32
    %c0_i32_0 = arith.constant 0 : i32
    %c0_i32_1 = arith.constant 0 : i32
    return %c0_i32, %c0_i32_0 : i32, i32
  }
  func.func @transform_3(%arg0: i32) -> (i32, i32) {
    %c0_i32 = arith.constant 0 : i32
    %c0_i32_0 = arith.constant 0 : i32
    return %c0_i32, %arg0 : i32, i32
  }
}

</mosaic_0001>

<llo_original>
// kernel: tpu_custom_call.1
$region0: #{tpu_custom_call.1}
  #allocation0 [shape = 'u32[]', space=smem, size = 0x4, offset = 0x4, fixed_abs, tag = 'smem constant byte address 0x4 - core index']
  #allocation1 [shape = 'u32[72,128]{1,0:T(1,128)}', space=vmem, size = 0x9000, scoped, tag = 'internal scratch']
  %s0 = inlined_call_operand.vmem [shape: f32[64,128], index: 0, kind: input, shape index: {}]
  %s1 = inlined_call_operand.vmem [shape: f32[80,64], index: 1, kind: input, shape index: {}]
  %s2 = inlined_call_operand.vmem [shape: f32[16,40], index: 2, kind: input, shape index: {}]
  %s3 = inlined_call_operand.hbm [shape: f32[16,128], index: 3, kind: output, shape index: {}]
  %s4 = sld [smem:[#allocation0]]
  $region22: #{tpu_custom_call.1} parent=0
    _
  %s6 = ssub.s32 1, %s4
  %s7 = scalar_select 0, %s6, %s4
  $region1: #{tpu_custom_call.1} parent=0
    #allocation2 [shape = 'u8[8192]{0}', space=vmem, size = 0x2000, scoped, tag = 'output window, operand 0, single buffered']
    #allocation3 [shape = 's32[1]{0}', space=sflag, size = 0x4, scoped, tag = 'scoped memory for tpu_custom_call.1']
    %8 = vsyncpa [#allocation3], 0
    // Predicated region
    $region2: #{tpu_custom_call.1} parent=1 // pred_check
      _
    $region3: #{tpu_custom_call.1} parent=1 // pred_check_branch
      %10 = sbr.rel (0) target = $region5
    $region4: #{tpu_custom_call.1} parent=1 // pred_region
      _
    $region5: #{tpu_custom_call.1} parent=1 // pred_fallthru
      _
    // Predicated region
    $region6: #{tpu_custom_call.1} parent=1 // pred_check
      _
    $region7: #{tpu_custom_call.1} parent=1 // pred_check_branch
      %12 = sbr.rel (0) target = $region9
    $region8: #{tpu_custom_call.1} parent=1 // pred_region
      _
    $region9: #{tpu_custom_call.1} parent=1 // pred_fallthru
      _
    // Predicated region
    $region10: #{tpu_custom_call.1} parent=1 // pred_check
      _
    $region11: #{tpu_custom_call.1} parent=1 // pred_check_branch
      %14 = sbr.rel (0) target = $region13
    $region12: #{tpu_custom_call.1} parent=1 // pred_region
      _
    $region13: #{tpu_custom_call.1} parent=1 // pred_fallthru
      _
    %v15 = vld [vmem:[%s1] sm:$0xff]
    %v16 = vld [vmem:[%s1 + $0x8] sm:$0xff]
    %v17 = vld [vmem:[%s1 + $0x10] sm:$0xff]
    %v18 = vld [vmem:[%s1 + $0x18] sm:$0xff]
    %v19 = vld [vmem:[%s1 + $0x20] sm:$0xff]
    %v20 = vld [vmem:[%s1 + $0x28] sm:$0xff]
    %v21 = vld [vmem:[%s1 + $0x30] sm:$0xff]
    %v22 = vld [vmem:[%s1 + $0x38] sm:$0xff]
    %v23 = vld [vmem:[%s1 + $0x40] sm:$0xff]
    %v24 = vld [vmem:[%s1 + $0x48] sm:$0xff]
    %v25 = vld [vmem:[%s0] sm:$0xff]
    %v26 = vld [vmem:[%s0 + $0x8] sm:$0xff]
    %v27 = vld [vmem:[%s0 + $0x10] sm:$0xff]
    %v28 = vld [vmem:[%s0 + $0x18] sm:$0xff]
    %v29 = vld [vmem:[%s0 + $0x20] sm:$0xff]
    %v30 = vld [vmem:[%s0 + $0x28] sm:$0xff]
    %v31 = vld [vmem:[%s0 + $0x30] sm:$0xff]
    %v32 = vld [vmem:[%s0 + $0x38] sm:$0xff]
    %vm33 = vcmask 523264
    %v35 = vsel %vm33, %v15, 0
    %v38 = vsel %vm33, %v16, 0
    %v41 = vsel %vm33, %v17, 0
    %v44 = vsel %vm33, %v18, 0
    %v47 = vsel %vm33, %v19, 0
    %v50 = vsel %vm33, %v20, 0
    %v53 = vsel %vm33, %v21, 0
    %v56 = vsel %vm33, %v22, 0
    %v59 = vsel %vm33, %v23, 0
    %v62 = vsel %vm33, %v24, 0
    %64 = vmatpush.msra.mxu0 0.0
    %65 = vmatpush.msra.mxu0 0.0
    %66 = vmatpush.msra.mxu0 0.0
    %67 = vmatpush.msra.mxu0 0.0
    %68 = vmatpush.msra.mxu0 0.0
    %69 = vmatpush.msra.mxu0 0.0
    %70 = vmatpush.msra.mxu0 0.0
    %71 = vmatpush.msra.mxu0 0.0
    %72 = vmatpush.msra.mxu0 %v32
    %73 = vmatpush.msra.mxu0 %v31
    %74 = vmatpush.msra.mxu0 %v30
    %75 = vmatpush.msra.mxu0 %v29
    %76 = vmatpush.msra.mxu0 %v28
    %77 = vmatpush.msra.mxu0 %v27
    %78 = vmatpush.msra.mxu0 %v26
    %79 = vmatpush.msra.mxu0 %v25
    %80 = vmatmul.f32.gmra.mxu0 %v35
    %v81 = vpop.f32.mrf.mxu0
    %v82 = vadd.f32 0.0, %v81
    %83 = vmatmul.f32.gmra.mxu0 %v38
    %v84 = vpop.f32.mrf.mxu0
    %v85 = vadd.f32 0.0, %v84
    %86 = vmatmul.f32.gmra.mxu0 %v41
    %v87 = vpop.f32.mrf.mxu0
    %v88 = vadd.f32 0.0, %v87
    %89 = vmatmul.f32.gmra.mxu0 %v44
    %v90 = vpop.f32.mrf.mxu0
    %v91 = vadd.f32 0.0, %v90
    %92 = vmatmul.f32.gmra.mxu0 %v47
    %v93 = vpop.f32.mrf.mxu0
    %v94 = vadd.f32 0.0, %v93
    %95 = vmatmul.f32.gmra.mxu0 %v50
    %v96 = vpop.f32.mrf.mxu0
    %v97 = vadd.f32 0.0, %v96
    %98 = vmatmul.f32.gmra.mxu0 %v53
    %v99 = vpop.f32.mrf.mxu0
    %v100 = vadd.f32 0.0, %v99
    %101 = vmatmul.f32.gmra.mxu0 %v56
    %v102 = vpop.f32.mrf.mxu0
    %v103 = vadd.f32 0.0, %v102
    %104 = vmatmul.f32.gmra.mxu0 %v59
    %v105 = vpop.f32.mrf.mxu0
    %v106 = vadd.f32 0.0, %v105
    %107 = vmatmul.f32.gmra.mxu0 %v62
    %v108 = vpop.f32.mrf.mxu0
    %v109 = vadd.f32 0.0, %v108
    %110 = vdwg.mxu0
    %v111 = vmul.f32 %v82, %v82
    %v112 = vmul.f32 %v85, %v85
    %v113 = vmul.f32 %v88, %v88
    %v114 = vmul.f32 %v91, %v91
    %v115 = vmul.f32 %v94, %v94
    %v116 = vmul.f32 %v97, %v97
    %v117 = vmul.f32 %v100, %v100
    %v118 = vmul.f32 %v103, %v103
    %v119 = vmul.f32 %v106, %v106
    %v120 = vmul.f32 %v109, %v109
    %v121 = vadd.f32 %v111, %v116
    %v122 = vadd.f32 %v112, %v117
    %v123 = vadd.f32 %v113, %v118
    %v124 = vadd.f32 %v114, %v119
    %v125 = vadd.f32 %v115, %v120
    %v126 = vld [vmem:[%s2] sm:$0xff]
    %v127 = vld [vmem:[%s2 + $0x8] sm:$0xff]
    %vm128 = vcmask 326656
    %v130 = vsel %vm128, %v126, 0
    %v133 = vsel %vm128, %v127, 0
    %135 = vmatpush.msra.mxu0 0.0
    %136 = vmatpush.msra.mxu0 0.0
    %137 = vmatpush.msra.mxu0 0.0
    %138 = vmatpush.msra.mxu0 0.0
    %139 = vmatpush.msra.mxu0 0.0
    %140 = vmatpush.msra.mxu0 0.0
    %141 = vmatpush.msra.mxu0 0.0
    %142 = vmatpush.msra.mxu0 0.0
    %143 = vmatpush.msra.mxu0 0.0
    %144 = vmatpush.msra.mxu0 0.0
    %145 = vmatpush.msra.mxu0 0.0
    %146 = vmatpush.msra.mxu0 %v125
    %147 = vmatpush.msra.mxu0 %v124
    %148 = vmatpush.msra.mxu0 %v123
    %149 = vmatpush.msra.mxu0 %v122
    %150 = vmatpush.msra.mxu0 %v121
    %151 = vmatmul.f32.gmra.mxu0 %v130
    %v152 = vpop.f32.mrf.mxu0
    %v153 = vadd.f32 0.0, %v152
    %154 = vmatmul.f32.gmra.mxu0 %v133
    %v155 = vpop.f32.mrf.mxu0
    %v156 = vadd.f32 0.0, %v155
    %157 = vdwg.mxu0
    %v158 = vmax.f32 %v153, 1e-05
    %v159 = vmax.f32 %v156, 1e-05
    %v160 = vlog2.pop %v158
    %v161 = vmul.f32 %v160, 0.6931472
    %v162 = vlog2.pop %v159
    %v163 = vmul.f32 %v162, 0.6931472
    %164 = vst [vmem:[#allocation2] sm:$0xff] %v161
    %165 = vst [vmem:[#allocation2 + $0x8] sm:$0xff] %v163
    // Predicated region
    $region14: #{tpu_custom_call.1} parent=1 // pred_check
      _
    $region15: #{tpu_custom_call.1} parent=1 // pred_check_branch
      %167 = sbr.rel (0) target = $region17
    $region16: #{tpu_custom_call.1} parent=1 // pred_region
      %169 = vsyncadd [#allocation3], 0
      %s170 = sshll.u32 [#allocation2], 4
      %s171 = int_to_ptr.vmem [resolvable:$true] %s170
      %s172 = sshll.u32 %s3, 4
      %s173 = int_to_ptr.hbm [resolvable:$true] %s172
      %178 = dma.vmem_to_hbm [thread:$0]  %s171, 256, %s173, [#allocation3], 128, 128, 8
    $region17: #{tpu_custom_call.1} parent=1 // pred_fallthru
      _
    // Predicated region
    $region18: #{tpu_custom_call.1} parent=1 // pred_check
      _
    $region19: #{tpu_custom_call.1} parent=1 // pred_check_branch
      %180 = sbr.rel (0) target = $region21
    $region20: #{tpu_custom_call.1} parent=1 // pred_region
      %182 = dma.done [#allocation3], 256
    $region21: #{tpu_custom_call.1} parent=1 // pred_fallthru
      _
    %183 = vsyncpa [#allocation3], 1

</llo_original>
